<compile_context>
chip_gen: v7x
topology: tpu7x:2x2x1
jax: 0.10.0
libtpu: 0.0.40
codegen_flags: <defaults>
</compile_context>

<pallas_src>
import functools

import jax
import jax.numpy as jnp
from jax import lax
from jax.experimental import pallas as pl
from jax.experimental.pallas import tpu as pltpu


def _res_layer_kernel(*refs, H, W, Cin, Cout, has_downsample):
    # refs = (xflat, w1_2d, w2_2d, [wd], out, a1p_scratch)
    if has_downsample:
        x_ref, w1_ref, w2_ref, wd_ref, out_ref, a1p_ref = refs
    else:
        x_ref, w1_ref, w2_ref, out_ref, a1p_ref = refs
        wd_ref = None

    Wp = W + 2                      # padded row stride
    M = H * Wp                      # flattened output positions (2 junk cols / row)
    offs = [dy * Wp + dx for dy in range(3) for dx in range(3)]

    # Padded, flattened input for this batch element: (Cin, Lp), bf16 -> f32.
    x2 = x_ref[0].astype(jnp.float32)

    # ---- conv1: single fused im2col matmul (bf16 operands, f32 accumulation) ----
    p1 = jnp.stack([x2[:, o:o + M] for o in offs], axis=0)          # (9, Cin, M)
    p1 = p1.reshape(9 * Cin, M).astype(jnp.bfloat16)
    a1 = jnp.dot(w1_ref[...], p1, preferred_element_type=jnp.float32)  # (Cout, M)
    a1 = jnp.maximum(a1, 0.0)                                       # ReLU (f32)

    # ---- reflect-pad the intermediate into a flattened (H+2, Wp) VMEM scratch ----
    # Bulk store of the interior (junk columns land on pad slots and are fixed below).
    a1p_ref[:, Wp + 1:Wp + 1 + M] = a1
    # Column pads: O(H) single-lane border copies (padded col 0 <- col 2, col W+1 <- col W-1).
    for hp in range(1, H + 1):
        b = hp * Wp
        a1p_ref[:, b:b + 1] = a1p_ref[:, b + 2:b + 3]
        a1p_ref[:, b + W + 1:b + W + 2] = a1p_ref[:, b + W - 1:b + W]
    # Row pads: padded row 0 <- row 2, padded row H+1 <- row H-1.
    a1p_ref[:, 0:Wp] = a1p_ref[:, 2 * Wp:3 * Wp]
    a1p_ref[:, (H + 1) * Wp:(H + 2) * Wp] = a1p_ref[:, (H - 1) * Wp:H * Wp]
    # Zero the over-read guard row so tap slices never touch stale VMEM.
    a1p_ref[:, (H + 2) * Wp:(H + 3) * Wp] = jnp.zeros((Cout, Wp), jnp.float32)

    # ---- conv2: single fused im2col matmul ----
    a1p = a1p_ref[...]
    p2 = jnp.stack([a1p[:, o:o + M] for o in offs], axis=0)         # (9, Cout, M)
    p2 = p2.reshape(9 * Cout, M).astype(jnp.bfloat16)
    acc2 = jnp.dot(w2_ref[...], p2, preferred_element_type=jnp.float32)  # (Cout, M)

    # ---- identity branch: interior of the SAME padded input stream ----
    ident = x2[:, Wp + 1:Wp + 1 + M]                                # (Cin, M), f32
    if has_downsample:
        ident = jnp.dot(wd_ref[...], ident.astype(jnp.bfloat16),
                        preferred_element_type=jnp.float32)         # (Cout, M)

    # ---- residual add + final ReLU (f32), lane-dense store ----
    out = jnp.maximum(acc2 + ident, 0.0)
    out_ref[...] = out.reshape(1, Cout, M).astype(out_ref.dtype)


@jax.jit
def res_layer_forward(x, w1, w2, wd=None):
    """ResLayer forward.

    x : (N, Cin, H, W) float32/bf16
    w1: (Cout, Cin, 3, 3), w2: (Cout, Cout, 3, 3)   (PyTorch OIHW layout)
    wd: (Cout, Cin) 1x1-conv weight, or None when Cin == Cout (downsample=None)
    returns (N, Cout, H, W) float32
    """
    N, Cin, H, W = x.shape
    Cout = w1.shape[0]
    if H < 2 or W < 2:
        raise ValueError("reflect pad=1 requires H >= 2 and W >= 2")
    has_downsample = Cin != Cout
    if has_downsample and wd is None:
        raise ValueError("wd must be provided when in_channels != out_channels")

    Wp = W + 2
    M = H * Wp
    Lp = (H + 3) * Wp  # one extra guard row so every tap slice stays in bounds

    # ---- wrapper-side glue (plain XLA): bf16 cast, reflect pad, flatten ----
    xb = x.astype(jnp.bfloat16)
    xpad = jnp.pad(xb, ((0, 0), (0, 0), (1, 1), (1, 1)), mode="reflect")
    xflat = xpad.reshape(N, Cin, (H + 2) * Wp)
    xflat = jnp.pad(xflat, ((0, 0), (0, 0), (0, Lp - (H + 2) * Wp)))

    # Weights as lane-dense 2-D bf16 slabs; contraction index = (tap, channel).
    w1_2d = jnp.transpose(w1, (0, 2, 3, 1)).reshape(Cout, 9 * Cin).astype(jnp.bfloat16)
    w2_2d = jnp.transpose(w2, (0, 2, 3, 1)).reshape(Cout, 9 * Cout).astype(jnp.bfloat16)

    kernel = functools.partial(_res_layer_kernel, H=H, W=W, Cin=Cin, Cout=Cout,
                               has_downsample=has_downsample)

    in_specs = [
        pl.BlockSpec((1, Cin, Lp), lambda n: (n, 0, 0)),
        pl.BlockSpec((Cout, 9 * Cin), lambda n: (0, 0)),
        pl.BlockSpec((Cout, 9 * Cout), lambda n: (0, 0)),
    ]
    args = [xflat, w1_2d, w2_2d]
    if has_downsample:
        in_specs.append(pl.BlockSpec((Cout, Cin), lambda n: (0, 0)))
        args.append(wd.astype(jnp.bfloat16))

    out_flat = pl.pallas_call(
        kernel,
        out_shape=jax.ShapeDtypeStruct((N, Cout, M), jnp.float32),
        grid_spec=pltpu.PrefetchScalarGridSpec(
            num_scalar_prefetch=0,
            grid=(N,),
            in_specs=in_specs,
            out_specs=pl.BlockSpec((1, Cout, M), lambda n: (n, 0, 0)),
            scratch_shapes=[pltpu.VMEM((Cout, Lp), jnp.float32)],
        ),
        compiler_params=pltpu.CompilerParams(
            dimension_semantics=("parallel",),
            vmem_limit_bytes=32 * 1024 * 1024,
        ),
    )(*args)

    # Lane-dense flat output -> NCHW (drop the 2 junk columns per row). Already
    # channel-major, so no transpose is needed.
    return out_flat.reshape(N, Cout, H, Wp)[:, :, :, :W]


def reference_forward(x, w1, w2, wd=None):
    """Pure-JAX f32 reference (mirrors the PyTorch forward)."""
    dn = ("NCHW", "OIHW", "NCHW")
    hp = lax.Precision.HIGHEST
    xp = jnp.pad(x, ((0, 0), (0, 0), (1, 1), (1, 1)), mode="reflect")
    o1 = lax.conv_general_dilated(xp, w1, (1, 1), "VALID",
                                  dimension_numbers=dn, precision=hp)
    o1 = jnp.maximum(o1, 0.0)
    o1p = jnp.pad(o1, ((0, 0), (0, 0), (1, 1), (1, 1)), mode="reflect")
    o2 = lax.conv_general_dilated(o1p, w2, (1, 1), "VALID",
                                  dimension_numbers=dn, precision=hp)
    ident = x if wd is None else jnp.einsum("oc,nchw->nohw", wd, x, precision=hp)
    return jnp.maximum(o2 + ident, 0.0)


if __name__ == "__main__":
    key = jax.random.PRNGKey(0)
    kx, k1, k2, k3 = jax.random.split(key, 4)

    N, Cin, Cout, H, W = 2, 4, 8, 16, 16   # Cin != Cout -> downsample branch active
    x = jax.random.normal(kx, (N, Cin, H, W), jnp.float32)
    w1 = jax.random.normal(k1, (Cout, Cin, 3, 3), jnp.float32) * (2.0 / (Cin * 9)) ** 0.5
    w2 = jax.random.normal(k2, (Cout, Cout, 3, 3), jnp.float32) * (2.0 / (Cout * 9)) ** 0.5
    wd = jax.random.normal(k3, (Cout, Cin), jnp.float32) * (2.0 / Cin) ** 0.5

    # Both paths consume the same bf16-representable values (kernel matmuls run in bf16).
    as_bf16_vals = lambda a: a.astype(jnp.bfloat16).astype(jnp.float32)
    xe, w1e, w2e, wde = map(as_bf16_vals, (x, w1, w2, wd))

    out = jax.block_until_ready(res_layer_forward(xe, w1e, w2e, wde))
    ref = jax.block_until_ready(reference_forward(xe, w1e, w2e, wde))
    assert out.shape == (N, Cout, H, W)
    err = float(jnp.max(jnp.abs(out - ref)))
    assert jnp.allclose(out, ref, rtol=3e-2, atol=3e-2), f"mismatch (max abs err {err})"

    # Cin == Cout -> downsample=None path (identity added directly, no wd DMA/matmul).
    xs = jax.random.normal(kx, (N, Cout, H, W), jnp.float32)
    w1s = jax.random.normal(k1, (Cout, Cout, 3, 3), jnp.float32) * (2.0 / (Cout * 9)) ** 0.5
    xse, w1se = map(as_bf16_vals, (xs, w1s))
    out2 = jax.block_until_ready(res_layer_forward(xse, w1se, w2e, None))
    ref2 = reference_forward(xse, w1se, w2e, None)
    assert jnp.allclose(out2, ref2, rtol=3e-2, atol=3e-2), "mismatch (Cin == Cout path)"

    # TODO(synk): normalisation / dropout / upsample branches are disabled by the
    # module defaults and are not implemented in the kernel.
    print("KERNEL_OK")
</pallas_src>

<mosaic_0001>
module attributes {stable_mosaic.version = 11 : i64} {
  func.func @_res_layer_kernel(%arg0: i32, %arg1: memref<1x4x342xbf16, #tpu.memory_space<vmem>>, %arg2: memref<8x36xbf16, #tpu.memory_space<vmem>>, %arg3: memref<8x72xbf16, #tpu.memory_space<vmem>>, %arg4: memref<8x4xbf16, #tpu.memory_space<vmem>>, %arg5: memref<1x8x288xf32, #tpu.memory_space<vmem>>, %arg6: memref<8x342xf32, #tpu.memory_space<vmem>>) attributes {dimension_semantics = [#tpu.dimension_semantics<parallel>], iteration_bounds = array<i64: 2>, scalar_prefetch = 0 : i64, scratch_operands = 1 : i64, tpu.core_type = #tpu.core_type<tc>, window_params = [{transform_indices = @transform_0, window_bounds = array<i64: 1, 4, 342>}, {pipeline_mode = #tpu.pipeline_mode<synchronous>, transform_indices = @transform_1, window_bounds = array<i64: 8, 36>}, {pipeline_mode = #tpu.pipeline_mode<synchronous>, transform_indices = @transform_2, window_bounds = array<i64: 8, 72>}, {pipeline_mode = #tpu.pipeline_mode<synchronous>, transform_indices = @transform_3, window_bounds = array<i64: 8, 4>}, {transform_indices = @transform_4, window_bounds = array<i64: 1, 8, 288>}]} {
    %c0 = arith.constant 0 : index
    %c0_0 = arith.constant 0 : index
    %c0_1 = arith.constant 0 : index
    %0 = vector.load %arg1[%c0, %c0_0, %c0_1] : memref<1x4x342xbf16, #tpu.memory_space<vmem>>, vector<1x4x342xbf16>
    %1 = vector.shape_cast %0 : vector<1x4x342xbf16> to vector<4x342xbf16>
    %2 = arith.extf %1 : vector<4x342xbf16> to vector<4x342xf32>
    %3 = vector.extract_strided_slice %2 {offsets = [0, 0], sizes = [4, 288], strides = [1, 1]} : vector<4x342xf32> to vector<4x288xf32>
    %4 = vector.extract_strided_slice %2 {offsets = [0, 1], sizes = [4, 288], strides = [1, 1]} : vector<4x342xf32> to vector<4x288xf32>
    %5 = vector.extract_strided_slice %2 {offsets = [0, 2], sizes = [4, 288], strides = [1, 1]} : vector<4x342xf32> to vector<4x288xf32>
    %6 = vector.extract_strided_slice %2 {offsets = [0, 18], sizes = [4, 288], strides = [1, 1]} : vector<4x342xf32> to vector<4x288xf32>
    %7 = vector.extract_strided_slice %2 {offsets = [0, 19], sizes = [4, 288], strides = [1, 1]} : vector<4x342xf32> to vector<4x288xf32>
    %8 = vector.extract_strided_slice %2 {offsets = [0, 20], sizes = [4, 288], strides = [1, 1]} : vector<4x342xf32> to vector<4x288xf32>
    %9 = vector.extract_strided_slice %2 {offsets = [0, 36], sizes = [4, 288], strides = [1, 1]} : vector<4x342xf32> to vector<4x288xf32>
    %10 = vector.extract_strided_slice %2 {offsets = [0, 37], sizes = [4, 288], strides = [1, 1]} : vector<4x342xf32> to vector<4x288xf32>
    %11 = vector.extract_strided_slice %2 {offsets = [0, 38], sizes = [4, 288], strides = [1, 1]} : vector<4x342xf32> to vector<4x288xf32>
    %12 = vector.shape_cast %3 : vector<4x288xf32> to vector<1x4x288xf32>
    %13 = vector.shape_cast %4 : vector<4x288xf32> to vector<1x4x288xf32>
    %14 = vector.shape_cast %5 : vector<4x288xf32> to vector<1x4x288xf32>
    %15 = vector.shape_cast %6 : vector<4x288xf32> to vector<1x4x288xf32>
    %16 = vector.shape_cast %7 : vector<4x288xf32> to vector<1x4x288xf32>
    %17 = vector.shape_cast %8 : vector<4x288xf32> to vector<1x4x288xf32>
    %18 = vector.shape_cast %9 : vector<4x288xf32> to vector<1x4x288xf32>
    %19 = vector.shape_cast %10 : vector<4x288xf32> to vector<1x4x288xf32>
    %20 = vector.shape_cast %11 : vector<4x288xf32> to vector<1x4x288xf32>
    %21 = tpu.concatenate %12, %13, %14, %15, %16, %17, %18, %19, %20 in 0 : vector<1x4x288xf32>, vector<1x4x288xf32>, vector<1x4x288xf32>, vector<1x4x288xf32>, vector<1x4x288xf32>, vector<1x4x288xf32>, vector<1x4x288xf32>, vector<1x4x288xf32>, vector<1x4x288xf32> -> vector<9x4x288xf32>
    %22 = vector.shape_cast %21 : vector<9x4x288xf32> to vector<36x288xf32>
    %23 = arith.truncf %22 : vector<36x288xf32> to vector<36x288xbf16>
    %c0_2 = arith.constant 0 : index
    %c0_3 = arith.constant 0 : index
    %24 = vector.load %arg2[%c0_2, %c0_3] : memref<8x36xbf16, #tpu.memory_space<vmem>>, vector<8x36xbf16>
    %cst = arith.constant dense<0.000000e+00> : vector<8x288xf32>
    %25 = tpu.matmul %24, %23, %cst {dimension_numbers = #tpu.dot_dimension_numbers<[1], [0], [0], [1], [0, 0, 1, 1], [], []>} : vector<8x36xbf16>, vector<36x288xbf16>, vector<8x288xf32> -> vector<8x288xf32>
    %cst_4 = arith.constant 0.000000e+00 : f32
    %26 = vector.broadcast %cst_4 : f32 to vector<8x288xf32>
    %27 = arith.maximumf %25, %26 : vector<8x288xf32>
    %c0_5 = arith.constant 0 : index
    %c19 = arith.constant 19 : index
    %28 = vector.load %arg6[%c0_5, %c19] : memref<8x342xf32, #tpu.memory_space<vmem>>, vector<8x288xf32>
    tpu.vector_store %arg6[%c0_5, %c19], %27 {strides = array<i32>} : memref<8x342xf32, #tpu.memory_space<vmem>>, vector<8x288xf32>,
    %c0_6 = arith.constant 0 : index
    %c20 = arith.constant 20 : index
    %29 = vector.load %arg6[%c0_6, %c20] : memref<8x342xf32, #tpu.memory_space<vmem>>, vector<8x1xf32>
    %c0_7 = arith.constant 0 : index
    %c18 = arith.constant 18 : index
    %30 = vector.load %arg6[%c0_7, %c18] : memref<8x342xf32, #tpu.memory_space<vmem>>, vector<8x1xf32>
    tpu.vector_store %arg6[%c0_7, %c18], %29 {strides = array<i32>} : memref<8x342xf32, #tpu.memory_space<vmem>>, vector<8x1xf32>,
    %c0_8 = arith.constant 0 : index
    %c33 = arith.constant 33 : index
    %31 = vector.load %arg6[%c0_8, %c33] : memref<8x342xf32, #tpu.memory_space<vmem>>, vector<8x1xf32>
    %c0_9 = arith.constant 0 : index
    %c35 = arith.constant 35 : index
    %32 = vector.load %arg6[%c0_9, %c35] : memref<8x342xf32, #tpu.memory_space<vmem>>, vector<8x1xf32>
    tpu.vector_store %arg6[%c0_9, %c35], %31 {strides = array<i32>} : memref<8x342xf32, #tpu.memory_space<vmem>>, vector<8x1xf32>,
    %c0_10 = arith.constant 0 : index
    %c38 = arith.constant 38 : index
    %33 = vector.load %arg6[%c0_10, %c38] : memref<8x342xf32, #tpu.memory_space<vmem>>, vector<8x1xf32>
    %c0_11 = arith.constant 0 : index
    %c36 = arith.constant 36 : index
    %34 = vector.load %arg6[%c0_11, %c36] : memref<8x342xf32, #tpu.memory_space<vmem>>, vector<8x1xf32>
    tpu.vector_store %arg6[%c0_11, %c36], %33 {strides = array<i32>} : memref<8x342xf32, #tpu.memory_space<vmem>>, vector<8x1xf32>,
    %c0_12 = arith.constant 0 : index
    %c51 = arith.constant 51 : index
    %35 = vector.load %arg6[%c0_12, %c51] : memref<8x342xf32, #tpu.memory_space<vmem>>, vector<8x1xf32>
    %c0_13 = arith.constant 0 : index
    %c53 = arith.constant 53 : index
    %36 = vector.load %arg6[%c0_13, %c53] : memref<8x342xf32, #tpu.memory_space<vmem>>, vector<8x1xf32>
    tpu.vector_store %arg6[%c0_13, %c53], %35 {strides = array<i32>} : memref<8x342xf32, #tpu.memory_space<vmem>>, vector<8x1xf32>,
    %c0_14 = arith.constant 0 : index
    %c56 = arith.constant 56 : index
    %37 = vector.load %arg6[%c0_14, %c56] : memref<8x342xf32, #tpu.memory_space<vmem>>, vector<8x1xf32>
    %c0_15 = arith.constant 0 : index
    %c54 = arith.constant 54 : index
    %38 = vector.load %arg6[%c0_15, %c54] : memref<8x342xf32, #tpu.memory_space<vmem>>, vector<8x1xf32>
    tpu.vector_store %arg6[%c0_15, %c54], %37 {strides = array<i32>} : memref<8x342xf32, #tpu.memory_space<vmem>>, vector<8x1xf32>,
    %c0_16 = arith.constant 0 : index
    %c69 = arith.constant 69 : index
    %39 = vector.load %arg6[%c0_16, %c69] : memref<8x342xf32, #tpu.memory_space<vmem>>, vector<8x1xf32>
    %c0_17 = arith.constant 0 : index
    %c71 = arith.constant 71 : index
    %40 = vector.load %arg6[%c0_17, %c71] : memref<8x342xf32, #tpu.memory_space<vmem>>, vector<8x1xf32>
    tpu.vector_store %arg6[%c0_17, %c71], %39 {strides = array<i32>} : memref<8x342xf32, #tpu.memory_space<vmem>>, vector<8x1xf32>,
    %c0_18 = arith.constant 0 : index
    %c74 = arith.constant 74 : index
    %41 = vector.load %arg6[%c0_18, %c74] : memref<8x342xf32, #tpu.memory_space<vmem>>, vector<8x1xf32>
    %c0_19 = arith.constant 0 : index
    %c72 = arith.constant 72 : index
    %42 = vector.load %arg6[%c0_19, %c72] : memref<8x342xf32, #tpu.memory_space<vmem>>, vector<8x1xf32>
    tpu.vector_store %arg6[%c0_19, %c72], %41 {strides = array<i32>} : memref<8x342xf32, #tpu.memory_space<vmem>>, vector<8x1xf32>,
    %c0_20 = arith.constant 0 : index
    %c87 = arith.constant 87 : index
    %43 = vector.load %arg6[%c0_20, %c87] : memref<8x342xf32, #tpu.memory_space<vmem>>, vector<8x1xf32>
    %c0_21 = arith.constant 0 : index
    %c89 = arith.constant 89 : index
    %44 = vector.load %arg6[%c0_21, %c89] : memref<8x342xf32, #tpu.memory_space<vmem>>, vector<8x1xf32>
    tpu.vector_store %arg6[%c0_21, %c89], %43 {strides = array<i32>} : memref<8x342xf32, #tpu.memory_space<vmem>>, vector<8x1xf32>,
    %c0_22 = arith.constant 0 : index
    %c92 = arith.constant 92 : index
    %45 = vector.load %arg6[%c0_22, %c92] : memref<8x342xf32, #tpu.memory_space<vmem>>, vector<8x1xf32>
    %c0_23 = arith.constant 0 : index
    %c90 = arith.constant 90 : index
    %46 = vector.load %arg6[%c0_23, %c90] : memref<8x342xf32, #tpu.memory_space<vmem>>, vector<8x1xf32>
    tpu.vector_store %arg6[%c0_23, %c90], %45 {strides = array<i32>} : memref<8x342xf32, #tpu.memory_space<vmem>>, vector<8x1xf32>,
    %c0_24 = arith.constant 0 : index
    %c105 = arith.constant 105 : index
    %47 = vector.load %arg6[%c0_24, %c105] : memref<8x342xf32, #tpu.memory_space<vmem>>, vector<8x1xf32>
    %c0_25 = arith.constant 0 : index
    %c107 = arith.constant 107 : index
    %48 = vector.load %arg6[%c0_25, %c107] : memref<8x342xf32, #tpu.memory_space<vmem>>, vector<8x1xf32>
    tpu.vector_store %arg6[%c0_25, %c107], %47 {strides = array<i32>} : memref<8x342xf32, #tpu.memory_space<vmem>>, vector<8x1xf32>,
    %c0_26 = arith.constant 0 : index
    %c110 = arith.constant 110 : index
    %49 = vector.load %arg6[%c0_26, %c110] : memref<8x342xf32, #tpu.memory_space<vmem>>, vector<8x1xf32>
    %c0_27 = arith.constant 0 : index
    %c108 = arith.constant 108 : index
    %50 = vector.load %arg6[%c0_27, %c108] : memref<8x342xf32, #tpu.memory_space<vmem>>, vector<8x1xf32>
    tpu.vector_store %arg6[%c0_27, %c108], %49 {strides = array<i32>} : memref<8x342xf32, #tpu.memory_space<vmem>>, vector<8x1xf32>,
    %c0_28 = arith.constant 0 : index
    %c123 = arith.constant 123 : index
    %51 = vector.load %arg6[%c0_28, %c123] : memref<8x342xf32, #tpu.memory_space<vmem>>, vector<8x1xf32>
    %c0_29 = arith.constant 0 : index
    %c125 = arith.constant 125 : index
    %52 = vector.load %arg6[%c0_29, %c125] : memref<8x342xf32, #tpu.memory_space<vmem>>, vector<8x1xf32>
    tpu.vector_store %arg6[%c0_29, %c125], %51 {strides = array<i32>} : memref<8x342xf32, #tpu.memory_space<vmem>>, vector<8x1xf32>,
    %c0_30 = arith.constant 0 : index
    %c128 = arith.constant 128 : index
    %53 = vector.load %arg6[%c0_30, %c128] : memref<8x342xf32, #tpu.memory_space<vmem>>, vector<8x1xf32>
    %c0_31 = arith.constant 0 : index
    %c126 = arith.constant 126 : index
    %54 = vector.load %arg6[%c0_31, %c126] : memref<8x342xf32, #tpu.memory_space<vmem>>, vector<8x1xf32>
    tpu.vector_store %arg6[%c0_31, %c126], %53 {strides = array<i32>} : memref<8x342xf32, #tpu.memory_space<vmem>>, vector<8x1xf32>,
    %c0_32 = arith.constant 0 : index
    %c141 = arith.constant 141 : index
    %55 = vector.load %arg6[%c0_32, %c141] : memref<8x342xf32, #tpu.memory_space<vmem>>, vector<8x1xf32>
    %c0_33 = arith.constant 0 : index
    %c143 = arith.constant 143 : index
    %56 = vector.load %arg6[%c0_33, %c143] : memref<8x342xf32, #tpu.memory_space<vmem>>, vector<8x1xf32>
    tpu.vector_store %arg6[%c0_33, %c143], %55 {strides = array<i32>} : memref<8x342xf32, #tpu.memory_space<vmem>>, vector<8x1xf32>,
    %c0_34 = arith.constant 0 : index
    %c146 = arith.constant 146 : index
    %57 = vector.load %arg6[%c0_34, %c146] : memref<8x342xf32, #tpu.memory_space<vmem>>, vector<8x1xf32>
    %c0_35 = arith.constant 0 : index
    %c144 = arith.constant 144 : index
    %58 = vector.load %arg6[%c0_35, %c144] : memref<8x342xf32, #tpu.memory_space<vmem>>, vector<8x1xf32>
    tpu.vector_store %arg6[%c0_35, %c144], %57 {strides = array<i32>} : memref<8x342xf32, #tpu.memory_space<vmem>>, vector<8x1xf32>,
    %c0_36 = arith.constant 0 : index
    %c159 = arith.constant 159 : index
    %59 = vector.load %arg6[%c0_36, %c159] : memref<8x342xf32, #tpu.memory_space<vmem>>, vector<8x1xf32>
    %c0_37 = arith.constant 0 : index
    %c161 = arith.constant 161 : index
    %60 = vector.load %arg6[%c0_37, %c161] : memref<8x342xf32, #tpu.memory_space<vmem>>, vector<8x1xf32>
    tpu.vector_store %arg6[%c0_37, %c161], %59 {strides = array<i32>} : memref<8x342xf32, #tpu.memory_space<vmem>>, vector<8x1xf32>,
    %c0_38 = arith.constant 0 : index
    %c164 = arith.constant 164 : index
    %61 = vector.load %arg6[%c0_38, %c164] : memref<8x342xf32, #tpu.memory_space<vmem>>, vector<8x1xf32>
    %c0_39 = arith.constant 0 : index
    %c162 = arith.constant 162 : index
    %62 = vector.load %arg6[%c0_39, %c162] : memref<8x342xf32, #tpu.memory_space<vmem>>, vector<8x1xf32>
    tpu.vector_store %arg6[%c0_39, %c162], %61 {strides = array<i32>} : memref<8x342xf32, #tpu.memory_space<vmem>>, vector<8x1xf32>,
    %c0_40 = arith.constant 0 : index
    %c177 = arith.constant 177 : index
    %63 = vector.load %arg6[%c0_40, %c177] : memref<8x342xf32, #tpu.memory_space<vmem>>, vector<8x1xf32>
    %c0_41 = arith.constant 0 : index
    %c179 = arith.constant 179 : index
    %64 = vector.load %arg6[%c0_41, %c179] : memref<8x342xf32, #tpu.memory_space<vmem>>, vector<8x1xf32>
    tpu.vector_store %arg6[%c0_41, %c179], %63 {strides = array<i32>} : memref<8x342xf32, #tpu.memory_space<vmem>>, vector<8x1xf32>,
    %c0_42 = arith.constant 0 : index
    %c182 = arith.constant 182 : index
    %65 = vector.load %arg6[%c0_42, %c182] : memref<8x342xf32, #tpu.memory_space<vmem>>, vector<8x1xf32>
    %c0_43 = arith.constant 0 : index
    %c180 = arith.constant 180 : index
    %66 = vector.load %arg6[%c0_43, %c180] : memref<8x342xf32, #tpu.memory_space<vmem>>, vector<8x1xf32>
    tpu.vector_store %arg6[%c0_43, %c180], %65 {strides = array<i32>} : memref<8x342xf32, #tpu.memory_space<vmem>>, vector<8x1xf32>,
    %c0_44 = arith.constant 0 : index
    %c195 = arith.constant 195 : index
    %67 = vector.load %arg6[%c0_44, %c195] : memref<8x342xf32, #tpu.memory_space<vmem>>, vector<8x1xf32>
    %c0_45 = arith.constant 0 : index
    %c197 = arith.constant 197 : index
    %68 = vector.load %arg6[%c0_45, %c197] : memref<8x342xf32, #tpu.memory_space<vmem>>, vector<8x1xf32>
    tpu.vector_store %arg6[%c0_45, %c197], %67 {strides = array<i32>} : memref<8x342xf32, #tpu.memory_space<vmem>>, vector<8x1xf32>,
    %c0_46 = arith.constant 0 : index
    %c200 = arith.constant 200 : index
    %69 = vector.load %arg6[%c0_46, %c200] : memref<8x342xf32, #tpu.memory_space<vmem>>, vector<8x1xf32>
    %c0_47 = arith.constant 0 : index
    %c198 = arith.constant 198 : index
    %70 = vector.load %arg6[%c0_47, %c198] : memref<8x342xf32, #tpu.memory_space<vmem>>, vector<8x1xf32>
    tpu.vector_store %arg6[%c0_47, %c198], %69 {strides = array<i32>} : memref<8x342xf32, #tpu.memory_space<vmem>>, vector<8x1xf32>,
    %c0_48 = arith.constant 0 : index
    %c213 = arith.constant 213 : index
    %71 = vector.load %arg6[%c0_48, %c213] : memref<8x342xf32, #tpu.memory_space<vmem>>, vector<8x1xf32>
    %c0_49 = arith.constant 0 : index
    %c215 = arith.constant 215 : index
    %72 = vector.load %arg6[%c0_49, %c215] : memref<8x342xf32, #tpu.memory_space<vmem>>, vector<8x1xf32>
    tpu.vector_store %arg6[%c0_49, %c215], %71 {strides = array<i32>} : memref<8x342xf32, #tpu.memory_space<vmem>>, vector<8x1xf32>,
    %c0_50 = arith.constant 0 : index
    %c218 = arith.constant 218 : index
    %73 = vector.load %arg6[%c0_50, %c218] : memref<8x342xf32, #tpu.memory_space<vmem>>, vector<8x1xf32>
    %c0_51 = arith.constant 0 : index
    %c216 = arith.constant 216 : index
    %74 = vector.load %arg6[%c0_51, %c216] : memref<8x342xf32, #tpu.memory_space<vmem>>, vector<8x1xf32>
    tpu.vector_store %arg6[%c0_51, %c216], %73 {strides = array<i32>} : memref<8x342xf32, #tpu.memory_space<vmem>>, vector<8x1xf32>,
    %c0_52 = arith.constant 0 : index
    %c231 = arith.constant 231 : index
    %75 = vector.load %arg6[%c0_52, %c231] : memref<8x342xf32, #tpu.memory_space<vmem>>, vector<8x1xf32>
    %c0_53 = arith.constant 0 : index
    %c233 = arith.constant 233 : index
    %76 = vector.load %arg6[%c0_53, %c233] : memref<8x342xf32, #tpu.memory_space<vmem>>, vector<8x1xf32>
    tpu.vector_store %arg6[%c0_53, %c233], %75 {strides = array<i32>} : memref<8x342xf32, #tpu.memory_space<vmem>>, vector<8x1xf32>,
    %c0_54 = arith.constant 0 : index
    %c236 = arith.constant 236 : index
    %77 = vector.load %arg6[%c0_54, %c236] : memref<8x342xf32, #tpu.memory_space<vmem>>, vector<8x1xf32>
    %c0_55 = arith.constant 0 : index
    %c234 = arith.constant 234 : index
    %78 = vector.load %arg6[%c0_55, %c234] : memref<8x342xf32, #tpu.memory_space<vmem>>, vector<8x1xf32>
    tpu.vector_store %arg6[%c0_55, %c234], %77 {strides = array<i32>} : memref<8x342xf32, #tpu.memory_space<vmem>>, vector<8x1xf32>,
    %c0_56 = arith.constant 0 : index
    %c249 = arith.constant 249 : index
    %79 = vector.load %arg6[%c0_56, %c249] : memref<8x342xf32, #tpu.memory_space<vmem>>, vector<8x1xf32>
    %c0_57 = arith.constant 0 : index
    %c251 = arith.constant 251 : index
    %80 = vector.load %arg6[%c0_57, %c251] : memref<8x342xf32, #tpu.memory_space<vmem>>, vector<8x1xf32>
    tpu.vector_store %arg6[%c0_57, %c251], %79 {strides = array<i32>} : memref<8x342xf32, #tpu.memory_space<vmem>>, vector<8x1xf32>,
    %c0_58 = arith.constant 0 : index
    %c254 = arith.constant 254 : index
    %81 = vector.load %arg6[%c0_58, %c254] : memref<8x342xf32, #tpu.memory_space<vmem>>, vector<8x1xf32>
    %c0_59 = arith.constant 0 : index
    %c252 = arith.constant 252 : index
    %82 = vector.load %arg6[%c0_59, %c252] : memref<8x342xf32, #tpu.memory_space<vmem>>, vector<8x1xf32>
    tpu.vector_store %arg6[%c0_59, %c252], %81 {strides = array<i32>} : memref<8x342xf32, #tpu.memory_space<vmem>>, vector<8x1xf32>,
    %c0_60 = arith.constant 0 : index
    %c267 = arith.constant 267 : index
    %83 = vector.load %arg6[%c0_60, %c267] : memref<8x342xf32, #tpu.memory_space<vmem>>, vector<8x1xf32>
    %c0_61 = arith.constant 0 : index
    %c269 = arith.constant 269 : index
    %84 = vector.load %arg6[%c0_61, %c269] : memref<8x342xf32, #tpu.memory_space<vmem>>, vector<8x1xf32>
    tpu.vector_store %arg6[%c0_61, %c269], %83 {strides = array<i32>} : memref<8x342xf32, #tpu.memory_space<vmem>>, vector<8x1xf32>,
    %c0_62 = arith.constant 0 : index
    %c272 = arith.constant 272 : index
    %85 = vector.load %arg6[%c0_62, %c272] : memref<8x342xf32, #tpu.memory_space<vmem>>, vector<8x1xf32>
    %c0_63 = arith.constant 0 : index
    %c270 = arith.constant 270 : index
    %86 = vector.load %arg6[%c0_63, %c270] : memref<8x342xf32, #tpu.memory_space<vmem>>, vector<8x1xf32>
    tpu.vector_store %arg6[%c0_63, %c270], %85 {strides = array<i32>} : memref<8x342xf32, #tpu.memory_space<vmem>>, vector<8x1xf32>,
    %c0_64 = arith.constant 0 : index
    %c285 = arith.constant 285 : index
    %87 = vector.load %arg6[%c0_64, %c285] : memref<8x342xf32, #tpu.memory_space<vmem>>, vector<8x1xf32>
    %c0_65 = arith.constant 0 : index
    %c287 = arith.constant 287 : index
    %88 = vector.load %arg6[%c0_65, %c287] : memref<8x342xf32, #tpu.memory_space<vmem>>, vector<8x1xf32>
    tpu.vector_store %arg6[%c0_65, %c287], %87 {strides = array<i32>} : memref<8x342xf32, #tpu.memory_space<vmem>>, vector<8x1xf32>,
    %c0_66 = arith.constant 0 : index
    %c290 = arith.constant 290 : index
    %89 = vector.load %arg6[%c0_66, %c290] : memref<8x342xf32, #tpu.memory_space<vmem>>, vector<8x1xf32>
    %c0_67 = arith.constant 0 : index
    %c288 = arith.constant 288 : index
    %90 = vector.load %arg6[%c0_67, %c288] : memref<8x342xf32, #tpu.memory_space<vmem>>, vector<8x1xf32>
    tpu.vector_store %arg6[%c0_67, %c288], %89 {strides = array<i32>} : memref<8x342xf32, #tpu.memory_space<vmem>>, vector<8x1xf32>,
    %c0_68 = arith.constant 0 : index
    %c303 = arith.constant 303 : index
    %91 = vector.load %arg6[%c0_68, %c303] : memref<8x342xf32, #tpu.memory_space<vmem>>, vector<8x1xf32>
    %c0_69 = arith.constant 0 : index
    %c305 = arith.constant 305 : index
    %92 = vector.load %arg6[%c0_69, %c305] : memref<8x342xf32, #tpu.memory_space<vmem>>, vector<8x1xf32>
    tpu.vector_store %arg6[%c0_69, %c305], %91 {strides = array<i32>} : memref<8x342xf32, #tpu.memory_space<vmem>>, vector<8x1xf32>,
    %c0_70 = arith.constant 0 : index
    %c36_71 = arith.constant 36 : index
    %93 = vector.load %arg6[%c0_70, %c36_71] : memref<8x342xf32, #tpu.memory_space<vmem>>, vector<8x18xf32>
    %c0_72 = arith.constant 0 : index
    %c0_73 = arith.constant 0 : index
    %94 = vector.load %arg6[%c0_72, %c0_73] : memref<8x342xf32, #tpu.memory_space<vmem>>, vector<8x18xf32>
    tpu.vector_store %arg6[%c0_72, %c0_73], %93 {strides = array<i32>} : memref<8x342xf32, #tpu.memory_space<vmem>>, vector<8x18xf32>,
    %c0_74 = arith.constant 0 : index
    %c270_75 = arith.constant 270 : index
    %95 = vector.load %arg6[%c0_74, %c270_75] : memref<8x342xf32, #tpu.memory_space<vmem>>, vector<8x18xf32>
    %c0_76 = arith.constant 0 : index
    %c306 = arith.constant 306 : index
    %96 = vector.load %arg6[%c0_76, %c306] : memref<8x342xf32, #tpu.memory_space<vmem>>, vector<8x18xf32>
    tpu.vector_store %arg6[%c0_76, %c306], %95 {strides = array<i32>} : memref<8x342xf32, #tpu.memory_space<vmem>>, vector<8x18xf32>,
    %cst_77 = arith.constant 0.000000e+00 : f32
    %97 = vector.broadcast %cst_77 : f32 to vector<8x18xf32>
    %c0_78 = arith.constant 0 : index
    %c324 = arith.constant 324 : index
    %98 = vector.load %arg6[%c0_78, %c324] : memref<8x342xf32, #tpu.memory_space<vmem>>, vector<8x18xf32>
    tpu.vector_store %arg6[%c0_78, %c324], %97 {strides = array<i32>} : memref<8x342xf32, #tpu.memory_space<vmem>>, vector<8x18xf32>,
    %c0_79 = arith.constant 0 : index
    %c0_80 = arith.constant 0 : index
    %99 = vector.load %arg6[%c0_79, %c0_80] : memref<8x342xf32, #tpu.memory_space<vmem>>, vector<8x342xf32>
    %100 = vector.extract_strided_slice %99 {offsets = [0, 0], sizes = [8, 288], strides = [1, 1]} : vector<8x342xf32> to vector<8x288xf32>
    %101 = vector.extract_strided_slice %99 {offsets = [0, 1], sizes = [8, 288], strides = [1, 1]} : vector<8x342xf32> to vector<8x288xf32>
    %102 = vector.extract_strided_slice %99 {offsets = [0, 2], sizes = [8, 288], strides = [1, 1]} : vector<8x342xf32> to vector<8x288xf32>
    %103 = vector.extract_strided_slice %99 {offsets = [0, 18], sizes = [8, 288], strides = [1, 1]} : vector<8x342xf32> to vector<8x288xf32>
    %104 = vector.extract_strided_slice %99 {offsets = [0, 19], sizes = [8, 288], strides = [1, 1]} : vector<8x342xf32> to vector<8x288xf32>
    %105 = vector.extract_strided_slice %99 {offsets = [0, 20], sizes = [8, 288], strides = [1, 1]} : vector<8x342xf32> to vector<8x288xf32>
    %106 = vector.extract_strided_slice %99 {offsets = [0, 36], sizes = [8, 288], strides = [1, 1]} : vector<8x342xf32> to vector<8x288xf32>
    %107 = vector.extract_strided_slice %99 {offsets = [0, 37], sizes = [8, 288], strides = [1, 1]} : vector<8x342xf32> to vector<8x288xf32>
    %108 = vector.extract_strided_slice %99 {offsets = [0, 38], sizes = [8, 288], strides = [1, 1]} : vector<8x342xf32> to vector<8x288xf32>
    %109 = vector.shape_cast %100 : vector<8x288xf32> to vector<1x8x288xf32>
    %110 = vector.shape_cast %101 : vector<8x288xf32> to vector<1x8x288xf32>
    %111 = vector.shape_cast %102 : vector<8x288xf32> to vector<1x8x288xf32>
    %112 = vector.shape_cast %103 : vector<8x288xf32> to vector<1x8x288xf32>
    %113 = vector.shape_cast %104 : vector<8x288xf32> to vector<1x8x288xf32>
    %114 = vector.shape_cast %105 : vector<8x288xf32> to vector<1x8x288xf32>
    %115 = vector.shape_cast %106 : vector<8x288xf32> to vector<1x8x288xf32>
    %116 = vector.shape_cast %107 : vector<8x288xf32> to vector<1x8x288xf32>
    %117 = vector.shape_cast %108 : vector<8x288xf32> to vector<1x8x288xf32>
    %118 = tpu.concatenate %109, %110, %111, %112, %113, %114, %115, %116, %117 in 0 : vector<1x8x288xf32>, vector<1x8x288xf32>, vector<1x8x288xf32>, vector<1x8x288xf32>, vector<1x8x288xf32>, vector<1x8x288xf32>, vector<1x8x288xf32>, vector<1x8x288xf32>, vector<1x8x288xf32> -> vector<9x8x288xf32>
    %119 = vector.shape_cast %118 : vector<9x8x288xf32> to vector<72x288xf32>
    %120 = arith.truncf %119 : vector<72x288xf32> to vector<72x288xbf16>
    %c0_81 = arith.constant 0 : index
    %c0_82 = arith.constant 0 : index
    %121 = vector.load %arg3[%c0_81, %c0_82] : memref<8x72xbf16, #tpu.memory_space<vmem>>, vector<8x72xbf16>
    %cst_83 = arith.constant dense<0.000000e+00> : vector<8x288xf32>
    %122 = tpu.matmul %121, %120, %cst_83 {dimension_numbers = #tpu.dot_dimension_numbers<[1], [0], [0], [1], [0, 0, 1, 1], [], []>} : vector<8x72xbf16>, vector<72x288xbf16>, vector<8x288xf32> -> vector<8x288xf32>
    %123 = vector.extract_strided_slice %2 {offsets = [0, 19], sizes = [4, 288], strides = [1, 1]} : vector<4x342xf32> to vector<4x288xf32>
    %c0_84 = arith.constant 0 : index
    %c0_85 = arith.constant 0 : index
    %124 = vector.load %arg4[%c0_84, %c0_85] : memref<8x4xbf16, #tpu.memory_space<vmem>>, vector<8x4xbf16>
    %125 = arith.truncf %123 : vector<4x288xf32> to vector<4x288xbf16>
    %cst_86 = arith.constant dense<0.000000e+00> : vector<8x288xf32>
    %126 = tpu.matmul %124, %125, %cst_86 {dimension_numbers = #tpu.dot_dimension_numbers<[1], [0], [0], [1], [0, 0, 1, 1], [], []>} : vector<8x4xbf16>, vector<4x288xbf16>, vector<8x288xf32> -> vector<8x288xf32>
    %127 = arith.addf %122, %126 : vector<8x288xf32>
    %cst_87 = arith.constant 0.000000e+00 : f32
    %128 = vector.broadcast %cst_87 : f32 to vector<8x288xf32>
    %129 = arith.maximumf %127, %128 : vector<8x288xf32>
    %130 = vector.shape_cast %129 : vector<8x288xf32> to vector<1x8x288xf32>
    %c0_88 = arith.constant 0 : index
    %c0_89 = arith.constant 0 : index
    %c0_90 = arith.constant 0 : index
    %131 = vector.load %arg5[%c0_88, %c0_89, %c0_90] : memref<1x8x288xf32, #tpu.memory_space<vmem>>, vector<1x8x288xf32>
    tpu.vector_store %arg5[%c0_88, %c0_89, %c0_90], %130 {strides = array<i32>} : memref<1x8x288xf32, #tpu.memory_space<vmem>>, vector<1x8x288xf32>,
    return
  }
  func.func @transform_0(%arg0: i32) -> (i32, i32, i32) {
    %c0_i32 = arith.constant 0 : i32
    %c0_i32_0 = arith.constant 0 : i32
    %c0_i32_1 = arith.constant 0 : i32
    return %arg0, %c0_i32, %c0_i32_0 : i32, i32, i32
  }
  func.func @transform_1(%arg0: i32) -> (i32, i32) {
    %c0_i32 = arith.constant 0 : i32
    %c0_i32_0 = arith.constant 0 : i32
    %c0_i32_1 = arith.constant 0 : i32
    return %c0_i32, %c0_i32_0 : i32, i32
  }
  func.func @transform_2(%arg0: i32) -> (i32, i32) {
    %c0_i32 = arith.constant 0 : i32
    %c0_i32_0 = arith.constant 0 : i32
    %c0_i32_1 = arith.constant 0 : i32
    return %c0_i32, %c0_i32_0 : i32, i32
  }
  func.func @transform_3(%arg0: i32) -> (i32, i32) {
    %c0_i32 = arith.constant 0 : i32
    %c0_i32_0 = arith.constant 0 : i32
    %c0_i32_1 = arith.constant 0 : i32
    return %c0_i32, %c0_i32_0 : i32, i32
  }
  func.func @transform_4(%arg0: i32) -> (i32, i32, i32) {
    %c0_i32 = arith.constant 0 : i32
    %c0_i32_0 = arith.constant 0 : i32
    %c0_i32_1 = arith.constant 0 : i32
    return %arg0, %c0_i32, %c0_i32_0 : i32, i32, i32
  }
}

</mosaic_0001>

<llo_original>
// kernel: res_layer_forward.1
$region0: #{res_layer_forward.1}
  #allocation0 [shape = 'u32[]', space=smem, size = 0x4, offset = 0x4, fixed_abs, tag = 'smem constant byte address 0x4 - core index']
  #allocation1 [shape = 'u32[144,128]{1,0:T(1,128)}', space=vmem, size = 0x12000, scoped, tag = 'internal scratch']
  #allocation2 [shape = 'f32[8,342]{1,0:T(8,128)}', space=vmem, size = 0x3000, scoped, tag = 'scratch operand']
  %s0 = inlined_call_operand.vmem [shape: bf16[2,4,342], index: 0, kind: input, shape index: {}]
  %s1 = inlined_call_operand.vmem [shape: bf16[8,36], index: 1, kind: input, shape index: {}]
  %s2 = inlined_call_operand.vmem [shape: bf16[8,72], index: 2, kind: input, shape index: {}]
  %s3 = inlined_call_operand.vmem [shape: bf16[8,4], index: 3, kind: input, shape index: {}]
  %s4 = inlined_call_operand.vmem [shape: f32[2,8,288], index: 4, kind: output, shape index: {}]
  %s5 = sld [smem:[#allocation0]]
  $region49: #{res_layer_forward.1} parent=0
    _
  %s7 = ssub.s32 1, %s5
  %s8 = scalar_select 0, %s7, %s5
  loop: start=0, step=1, limit=4
  $region2: #{res_layer_forward.1} parent=0 // loop_pre_header
    _
  $region3: #{res_layer_forward.1} parent=0 // loop_header
    %s10 = sphi 0, %s14
    %p11 = scmp.ge.s32.totalorder %s10, 4
    %s20 = sphi 0, %s22
    %s23 = sphi 0, %s20
    %s24 = sphi 0, %s23
    %s40 = sphi 0, %s24
    %s44 = sphi 0, %s44
    %s46 = sphi 0, %s44
    %s47 = sphi 0, %s46
    %s61 = sphi 0, %s47
    %s65 = sphi 0, %s65
    %s67 = sphi 0, %s65
    %s68 = sphi 0, %s67
    %s82 = sphi 0, %s68
    %s86 = sphi 0, %s86
    %s88 = sphi 0, %s86
    %s89 = sphi 0, %s88
    %s103 = sphi 0, %s89
    %s109 = sphi 0, %s111
    %s112 = sphi 0, %s109
    %s113 = sphi 0, %s112
    %s129 = sphi 0, %s113
  $region4: #{res_layer_forward.1} parent=0 // loop_header_branch
    %13 = sbr.rel (%p11) target = $region8
  $region5: #{res_layer_forward.1} parent=0 // loop_body
    %s15 = ssub.s32 %s10, 1
    %s16 = ssub.s32 %s10, 2
    %s17 = sadd.s32 %s10, 1
    %s18 = ssub.s32 %s10, %s17
    %p19 = scmp.eq.s32.totalorder %s18, 0
    %s21 = sadd.s32 %s20, 1
    %s22 = scalar_select %p19, %s20, %s21
    %p25 = pneg %p19
    %p26 = scmp.eq.s32.totalorder %s10, 1
    %p27 = por %p25, %p26
    %p28 = scmp.ne.s32.totalorder %s20, %s23
    %p29 = scmp.eq.s32.totalorder %s10, 0
    %p30 = por %p28, %p29
    %p31 = scmp.ne.s32.totalorder %s20, %s23
    %p32 = scmp.eq.s32.totalorder %s15, 1
    %p33 = por %p31, %p32
    %p34 = scmp.ne.s32.totalorder %s23, %s24
    %p35 = scmp.eq.s32.totalorder %s15, 0
    %p36 = por %p34, %p35
    %p37 = scmp.ne.s32.totalorder %s23, %s24
    %p38 = scmp.eq.s32.totalorder %s16, 1
    %p39 = por %p37, %p38
    %p41 = scmp.ne.s32.totalorder %s24, %s40
    %p42 = scmp.eq.s32.totalorder %s16, 0
    %p43 = por %p41, %p42
    %s45 = sadd.s32 %s44, 1
    %p48 = scmp.eq.s32.totalorder %s10, 1
    %p49 = scmp.ne.s32.totalorder %s44, %s46
    %p50 = scmp.eq.s32.totalorder %s10, 0
    %p51 = por %p49, %p50
    %p52 = scmp.ne.s32.totalorder %s44, %s46
    %p53 = scmp.eq.s32.totalorder %s15, 1
    %p54 = por %p52, %p53
    %p55 = scmp.ne.s32.totalorder %s46, %s47
    %p56 = scmp.eq.s32.totalorder %s15, 0
    %p57 = por %p55, %p56
    %p58 = scmp.ne.s32.totalorder %s46, %s47
    %p59 = scmp.eq.s32.totalorder %s16, 1
    %p60 = por %p58, %p59
    %p62 = scmp.ne.s32.totalorder %s47, %s61
    %p63 = scmp.eq.s32.totalorder %s16, 0
    %p64 = por %p62, %p63
    %s66 = sadd.s32 %s65, 1
    %p69 = scmp.eq.s32.totalorder %s10, 1
    %p70 = scmp.ne.s32.totalorder %s65, %s67
    %p71 = scmp.eq.s32.totalorder %s10, 0
    %p72 = por %p70, %p71
    %p73 = scmp.ne.s32.totalorder %s65, %s67
    %p74 = scmp.eq.s32.totalorder %s15, 1
    %p75 = por %p73, %p74
    %p76 = scmp.ne.s32.totalorder %s67, %s68
    %p77 = scmp.eq.s32.totalorder %s15, 0
    %p78 = por %p76, %p77
    %p79 = scmp.ne.s32.totalorder %s67, %s68
    %p80 = scmp.eq.s32.totalorder %s16, 1
    %p81 = por %p79, %p80
    %p83 = scmp.ne.s32.totalorder %s68, %s82
    %p84 = scmp.eq.s32.totalorder %s16, 0
    %p85 = por %p83, %p84
    %s87 = sadd.s32 %s86, 1
    %p90 = scmp.eq.s32.totalorder %s10, 1
    %p91 = scmp.ne.s32.totalorder %s86, %s88
    %p92 = scmp.eq.s32.totalorder %s10, 0
    %p93 = por %p91, %p92
    %p94 = scmp.ne.s32.totalorder %s86, %s88
    %p95 = scmp.eq.s32.totalorder %s15, 1
    %p96 = por %p94, %p95
    %p97 = scmp.ne.s32.totalorder %s88, %s89
    %p98 = scmp.eq.s32.totalorder %s15, 0
    %p99 = por %p97, %p98
    %p100 = scmp.ne.s32.totalorder %s88, %s89
    %p101 = scmp.eq.s32.totalorder %s16, 1
    %p102 = por %p100, %p101
    %p104 = scmp.ne.s32.totalorder %s89, %s103
    %p105 = scmp.eq.s32.totalorder %s16, 0
    %p106 = por %p104, %p105
    %s107 = ssub.s32 %s10, %s17
    %p108 = scmp.eq.s32.totalorder %s107, 0
    %s110 = sadd.s32 %s109, 1
    %s111 = scalar_select %p108, %s109, %s110
    %p114 = pneg %p108
    %p115 = scmp.eq.s32.totalorder %s10, 1
    %p116 = por %p114, %p115
    %p117 = scmp.ne.s32.totalorder %s109, %s112
    %p118 = scmp.eq.s32.totalorder %s10, 0
    %p119 = por %p117, %p118
    %p120 = scmp.ne.s32.totalorder %s109, %s112
    %p121 = scmp.eq.s32.totalorder %s15, 1
    %p122 = por %p120, %p121
    %p123 = scmp.ne.s32.totalorder %s112, %s113
    %p124 = scmp.eq.s32.totalorder %s15, 0
    %p125 = por %p123, %p124
    %p126 = scmp.ne.s32.totalorder %s112, %s113
    %p127 = scmp.eq.s32.totalorder %s16, 1
    %p128 = por %p126, %p127
    %p130 = scmp.ne.s32.totalorder %s113, %s129
    %p131 = scmp.eq.s32.totalorder %s16, 0
    %p132 = por %p130, %p131
    %p133 = scmp.le.s32.totalorder 1, %s10
    %p134 = scmp.lt.s32.totalorder %s10, 3
    %p135 = pnand %p133, %p134
    %p136 = pneg %p135
    // Predicated region
    $region9: #{res_layer_forward.1} parent=5 // pred_check
      _
    $region10: #{res_layer_forward.1} parent=5 // pred_check_branch
      %138 = sbr.rel (%p135) target = $region12
    $region11: #{res_layer_forward.1} parent=5 // pred_region
      %s139 = ssub.s32 %s10, 1
      // Predicated region
      $region13: #{res_layer_forward.1} parent=11 // pred_check
        %p140 = pneg %p57
      $region14: #{res_layer_forward.1} parent=11 // pred_check_branch
        %142 = sbr.rel (%p140) target = $region16
      $region15: #{res_layer_forward.1} parent=11 // pred_region
        _
      $region16: #{res_layer_forward.1} parent=11 // pred_fallthru
        _
      // Predicated region
      $region17: #{res_layer_forward.1} parent=11 // pred_check
        %p143 = pneg %p78
      $region18: #{res_layer_forward.1} parent=11 // pred_check_branch
        %145 = sbr.rel (%p143) target = $region20
      $region19: #{res_layer_forward.1} parent=11 // pred_region
        _
      $region20: #{res_layer_forward.1} parent=11 // pred_fallthru
        _
      // Predicated region
      $region21: #{res_layer_forward.1} parent=11 // pred_check
        %p146 = pneg %p99
      $region22: #{res_layer_forward.1} parent=11 // pred_check_branch
        %148 = sbr.rel (%p146) target = $region24
      $region23: #{res_layer_forward.1} parent=11 // pred_region
        _
      $region24: #{res_layer_forward.1} parent=11 // pred_fallthru
        _
    $region12: #{res_layer_forward.1} parent=5 // pred_fallthru
      _
    %p149 = scmp.lt.s32.totalorder %s10, 2
    // Predicated region
    $region25: #{res_layer_forward.1} parent=5 // pred_check
      %p150 = pneg %p149
    $region26: #{res_layer_forward.1} parent=5 // pred_check_branch
      %152 = sbr.rel (%p150) target = $region28
    $region27: #{res_layer_forward.1} parent=5 // pred_region
      // Predicated region
      $region29: #{res_layer_forward.1} parent=27 // pred_check
        %p153 = pneg %p30
      $region30: #{res_layer_forward.1} parent=27 // pred_check_branch
        %155 = sbr.rel (%p153) target = $region32
      $region31: #{res_layer_forward.1} parent=27 // pred_region
        %p156 = scmp.lt.s32.totalorder %s10, 1
        %s157 = scalar_select %p156, %s10, 1
        %s158 = smul.addr %s157, 3
        %s159 = smul.addr %s158, 2
        %s160 = scalar_lea.vmem %s0, %s159
      $region32: #{res_layer_forward.1} parent=27 // pred_fallthru
        _
    $region28: #{res_layer_forward.1} parent=5 // pred_fallthru
      _
    %p161 = scmp.le.s32.totalorder 1, %s10
    %p162 = scmp.lt.s32.totalorder %s10, 3
    %p163 = pnand %p161, %p162
    %p164 = pneg %p163
    // Predicated region
    $region33: #{res_layer_forward.1} parent=5 // pred_check
      _
    $region34: #{res_layer_forward.1} parent=5 // pred_check_branch
      %166 = sbr.rel (%p163) target = $region36
    $region35: #{res_layer_forward.1} parent=5 // pred_region
      %s167 = ssub.s32 %s10, 1
      %p168 = scmp.lt.s32.totalorder %s15, 1
      %s169 = scalar_select %p168, %s15, 1
      %s170 = smul.addr %s169, 3
      %s171 = smul.addr %s170, 2
      %s172 = scalar_lea.vmem %s0, %s171
      %p173 = pneg %p36
      %p174 = pneg %p33
      %p175 = pneg %p57
      %p176 = pneg %p54
      %p177 = pneg %p78
      %p178 = pneg %p75
      %p179 = pneg %p99
      %p180 = pneg %p96
      %p181 = pneg %p125
      %p182 = pneg %p122
      %p183 = scmp.lt.s32.totalorder %s15, 1
      %s184 = scalar_select %p183, %s15, 1
      %s185 = smul.addr %s184, 3
      %s186 = smul.addr %s185, 8
      %s187 = scalar_lea.vmem %s4, %s186
      %p188 = scmp.lt.s32.totalorder %s15, 1
      %s189 = scalar_select %p188, %s15, 1
      %s190 = smul.addr %s189, 3
      %s191 = smul.addr %s190, 2
      %s192 = scalar_lea.vmem %s0, %s191
      %p193 = scmp.lt.s32.totalorder %s15, 1
      %s194 = scalar_select %p193, %s15, 1
      %s195 = smul.addr %s194, 3
      %s196 = smul.addr %s195, 8
      %s197 = scalar_lea.vmem %s4, %s196
      %v199 = vld [vmem:[%s192] sm:$0x3f]
      %v200 = vunpack.c.l.bf16 %v199
      %v201 = vunpack.c.h.bf16 %v199
      %204 = vrot.lane.b32.xlu0 %v200, 127
      %v205 = vpop.permute.xlu0 %204
      %206 = vrot.lane.b32.xlu0 %v201, 127
      %v207 = vpop.permute.xlu0 %206
      %v208 = vrot.slane %v205, 4
      %v209 = vrot.slane %v207, 4
      %vm210 = vcmask 1043456
      %v211 = vsel %vm210, %v208, %v209
      %vm212 = vcmask 1039360
      %v213 = vsel %vm212, %v205, %v211
      %214 = vrot.lane.b32.xlu0 %v200, 126
      %v215 = vpop.permute.xlu0 %214
      %216 = vrot.lane.b32.xlu0 %v201, 126
      %v217 = vpop.permute.xlu0 %216
      %v218 = vrot.slane %v215, 4
      %v219 = vrot.slane %v217, 4
      %v220 = vsel %vm210, %v218, %v219
      %vm221 = vcmask 1031168
      %v222 = vsel %vm221, %v215, %v220
      %223 = vrot.lane.b32.xlu0 %v200, 110
      %v224 = vpop.permute.xlu0 %223
      %225 = vrot.lane.b32.xlu0 %v201, 110
      %v226 = vpop.permute.xlu0 %225
      %v227 = vrot.slane %v224, 4
      %v228 = vrot.slane %v226, 4
      %v229 = vsel %vm210, %v227, %v228
      %vm230 = vcmask 900096
      %v231 = vsel %vm230, %v224, %v229
      %232 = vrot.lane.b32.xlu0 %v200, 109
      %v233 = vpop.permute.xlu0 %232
      %234 = vrot.lane.b32.xlu0 %v201, 109
      %v235 = vpop.permute.xlu0 %234
      %v236 = vrot.slane %v233, 4
      %v237 = vrot.slane %v235, 4
      %v238 = vsel %vm210, %v236, %v237
      %vm239 = vcmask 891904
      %v240 = vsel %vm239, %v233, %v238
      %241 = vrot.lane.b32.xlu0 %v200, 108
      %v242 = vpop.permute.xlu0 %241
      %243 = vrot.lane.b32.xlu0 %v201, 108
      %v244 = vpop.permute.xlu0 %243
      %v245 = vrot.slane %v242, 4
      %v246 = vrot.slane %v244, 4
      %v247 = vsel %vm210, %v245, %v246
      %vm248 = vcmask 883712
      %v249 = vsel %vm248, %v242, %v247
      %250 = vrot.lane.b32.xlu0 %v200, 92
      %v251 = vpop.permute.xlu0 %250
      %252 = vrot.lane.b32.xlu0 %v201, 92
      %v253 = vpop.permute.xlu0 %252
      %v254 = vrot.slane %v251, 4
      %v255 = vrot.slane %v253, 4
      %v256 = vsel %vm210, %v254, %v255
      %vm257 = vcmask 752640
      %v258 = vsel %vm257, %v251, %v256
      %259 = vrot.lane.b32.xlu0 %v200, 91
      %v260 = vpop.permute.xlu0 %259
      %261 = vrot.lane.b32.xlu0 %v201, 91
      %v262 = vpop.permute.xlu0 %261
      %v263 = vrot.slane %v260, 4
      %v264 = vrot.slane %v262, 4
      %v265 = vsel %vm210, %v263, %v264
      %vm266 = vcmask 744448
      %v267 = vsel %vm266, %v260, %v265
      %268 = vrot.lane.b32.xlu0 %v200, 90
      %v269 = vpop.permute.xlu0 %268
      %270 = vrot.lane.b32.xlu0 %v201, 90
      %v271 = vpop.permute.xlu0 %270
      %v272 = vrot.slane %v269, 4
      %v273 = vrot.slane %v271, 4
      %v274 = vsel %vm210, %v272, %v273
      %vm275 = vcmask 736256
      %v276 = vsel %vm275, %v269, %v274
      %v279 = vcombine.low %v200, %v213
      %v280 = vcombine.high %v200, %v213
      %v281 = vcombine.low %v201, %v207
      %v282 = vcombine.low %v222, %v231
      %v283 = vcombine.high %v222, %v231
      %v284 = vcombine.low %v217, %v226
      %v285 = vcombine.low %v240, %v249
      %v286 = vcombine.high %v240, %v249
      %v287 = vcombine.low %v235, %v244
      %v288 = vcombine.low %v258, %v267
      %v289 = vcombine.high %v258, %v267
      %v290 = vcombine.low %v253, %v262
      %v291 = vcombine.high %v276, %v276
      %v305 = vpack.c.bf16 %v282, %v279
      %v306 = vpack.c.bf16 %v283, %v280
      %v307 = vpack.c.bf16 %v284, %v281
      %v308 = vpack.c.bf16 %v288, %v285
      %v309 = vpack.c.bf16 %v289, %v286
      %v310 = vpack.c.bf16 %v290, %v287
      %v311 = vpack.c.bf16 %v276, %v276
      %v312 = vpack.c.bf16 %v291, %v291
      %v313 = vpack.c.bf16 %v271, %v271
      %v314 = vld [vmem:[%s1] sm:$0xf]
      %vm315 = vcmask 293888
      %v317 = vsel %vm315, %v314, 0
      %vm319 = vcmask 1041408
      %v321 = vsel %vm319, %v311, 0
      %v324 = vsel %vm319, %v312, 0
      %v327 = vsel %vm319, %v313, 0
      %329 = vmatprep.subr.bf16.mxu0 %v306
      %330 = vmatpush1.bf16.msra.mxu0 %v305
      %331 = vmatprep.subr.bf16.mxu0 %v309
      %332 = vmatpush1.bf16.msra.mxu0 %v308
      %333 = vmatprep.subr.bf16.mxu0 %v324
      %334 = vmatpush1.bf16.msra.mxu0 %v321
      %335 = vmatprep.subr.bf16.mxu0 0
      %336 = vmatpush1.bf16.msra.mxu0 0
      %337 = vmatprep.subr.bf16.mxu0 0
      %338 = vmatpush1.bf16.msra.mxu0 0
      %339 = vmatprep.subr.bf16.mxu0 0
      %340 = vmatpush1.bf16.msra.mxu0 0
      %341 = vmatprep.subr.bf16.mxu0 0
      %342 = vmatpush1.bf16.msra.mxu0 0
      %343 = vmatprep.subr.bf16.mxu0 0
      %344 = vmatpush1.bf16.msra.mxu0 0
      %345 = vmatprep.subr.bf16.mxu0 0
      %346 = vmatpush1.bf16.msra.mxu0 0
      %347 = vmatprep.subr.bf16.mxu0 0
      %348 = vmatpush1.bf16.msra.mxu0 0
      %349 = vmatprep.subr.bf16.mxu0 0
      %350 = vmatpush1.bf16.msra.mxu0 0
      %351 = vmatprep.subr.bf16.mxu0 0
      %352 = vmatpush1.bf16.msra.mxu0 0
      %353 = vmatprep.subr.bf16.mxu0 0
      %354 = vmatpush1.bf16.msra.mxu0 0
      %355 = vmatprep.subr.bf16.mxu0 0
      %356 = vmatpush1.bf16.msra.mxu0 0
      %357 = vmatprep.subr.bf16.mxu0 0
      %358 = vmatpush1.bf16.msra.mxu0 0
      %359 = vmatprep.subr.bf16.mxu0 0
      %360 = vmatpush1.bf16.msra.mxu0 0
      %361 = vmatprep.mubr.bf16.mxu0 0
      %362 = vmatmul.mubr.bf16.gmra.mrb[0].mxu0 %v317
      %v363 = vpop.f32.mrb[0].mxu0
      %v364 = vadd.f32 0.0, %v363
      %v365 = vpop.f32.mrb[0].mxu0
      %v366 = vadd.f32 0.0, %v365
      %v367 = vpop.f32.mrb[0].mxu0
      %v368 = vpop.f32.mrb[0].mxu0
      %369 = vdwg.mxu0
      %370 = vmatprep.subr.bf16.mxu0 0
      %371 = vmatpush1.bf16.msra.mxu0 %v307
      %372 = vmatprep.subr.bf16.mxu0 0
      %373 = vmatpush1.bf16.msra.mxu0 %v310
      %374 = vmatprep.subr.bf16.mxu0 0
      %375 = vmatpush1.bf16.msra.mxu0 %v327
      %376 = vmatprep.subr.bf16.mxu0 0
      %377 = vmatpush1.bf16.msra.mxu0 0
      %378 = vmatprep.subr.bf16.mxu0 0
      %379 = vmatpush1.bf16.msra.mxu0 0
      %380 = vmatprep.subr.bf16.mxu0 0
      %381 = vmatpush1.bf16.msra.mxu0 0
      %382 = vmatprep.subr.bf16.mxu0 0
      %383 = vmatpush1.bf16.msra.mxu0 0
      %384 = vmatprep.subr.bf16.mxu0 0
      %385 = vmatpush1.bf16.msra.mxu0 0
      %386 = vmatprep.subr.bf16.mxu0 0
      %387 = vmatpush1.bf16.msra.mxu0 0
      %388 = vmatprep.subr.bf16.mxu0 0
      %389 = vmatpush1.bf16.msra.mxu0 0
      %390 = vmatprep.subr.bf16.mxu0 0
      %391 = vmatpush1.bf16.msra.mxu0 0
      %392 = vmatprep.subr.bf16.mxu0 0
      %393 = vmatpush1.bf16.msra.mxu0 0
      %394 = vmatprep.subr.bf16.mxu0 0
      %395 = vmatpush1.bf16.msra.mxu0 0
      %396 = vmatprep.subr.bf16.mxu0 0
      %397 = vmatpush1.bf16.msra.mxu0 0
      %398 = vmatprep.subr.bf16.mxu0 0
      %399 = vmatpush1.bf16.msra.mxu0 0
      %400 = vmatprep.subr.bf16.mxu0 0
      %401 = vmatpush1.bf16.msra.mxu0 0
      %402 = vmatprep.mubr.bf16.mxu0 0
      %403 = vmatmul.mubr.bf16.gmra.mrb[0].mxu0 %v317
      %v404 = vpop.f32.mrb[0].mxu0
      %v405 = vadd.f32 0.0, %v404
      %v406 = vpop.f32.mrb[0].mxu0
      %v407 = vpop.f32.mrb[0].mxu0
      %v408 = vpop.f32.mrb[0].mxu0
      %409 = vdwg.mxu0
      %v410 = vmax.f32 %v364, 0.0
      %v411 = vmax.f32 %v366, 0.0
      %v412 = vmax.f32 %v405, 0.0
      %416 = vrot.lane.b32.xlu0 %v410, 19
      %v417 = vpop.permute.xlu0 %416
      %418 = vrot.lane.b32.xlu0 %v411, 19
      %v419 = vpop.permute.xlu0 %418
      %420 = vrot.lane.b32.xlu0 %v412, 19
      %v421 = vpop.permute.xlu0 %420
      %vm422 = vcmask 154624
      %v423 = vsel %vm422, %v417, %v419
      %v424 = vsel %vm422, %v419, %v421
      %vm428 = vcmask 1047704
      %429 = vst.msk [vmem:[#allocation2] sm:$0xff] %vm428, %v417
      %430 = vst [vmem:[#allocation2 + $0x8] sm:$0xff] %v423
      %vm431 = vcmask 416768
      %432 = vst.msk [vmem:[#allocation2 + $0x10] sm:$0xff] %vm431, %v424
      %v433 = vld [vmem:[#allocation2] sm:$0xff]
      %435 = vrot.lane.b32.xlu0 %v433, 126
      %v436 = vpop.permute.xlu0 %435
      %vm438 = vcmask 154768
      %439 = vst.msk [vmem:[#allocation2] sm:$0xff] %vm438, %v436
      %v440 = vld [vmem:[#allocation2] sm:$0xff]
      %442 = vrot.lane.b32.xlu0 %v440, 2
      %v443 = vpop.permute.xlu0 %442
      %vm445 = vcmask 294168
      %446 = vst.msk [vmem:[#allocation2] sm:$0xff] %vm445, %v443
      %v447 = vld [vmem:[#allocation2] sm:$0xff]
      %449 = vrot.lane.b32.xlu0 %v447, 126
      %v450 = vpop.permute.xlu0 %449
      %vm452 = vcmask 302368
      %453 = vst.msk [vmem:[#allocation2] sm:$0xff] %vm452, %v450
      %v454 = vld [vmem:[#allocation2] sm:$0xff]
      %456 = vrot.lane.b32.xlu0 %v454, 2
      %v457 = vpop.permute.xlu0 %456
      %vm459 = vcmask 441768
      %460 = vst.msk [vmem:[#allocation2] sm:$0xff] %vm459, %v457
      %v461 = vld [vmem:[#allocation2] sm:$0xff]
      %463 = vrot.lane.b32.xlu0 %v461, 126
      %v464 = vpop.permute.xlu0 %463
      %vm466 = vcmask 449968
      %467 = vst.msk [vmem:[#allocation2] sm:$0xff] %vm466, %v464
      %v468 = vld [vmem:[#allocation2] sm:$0xff]
      %470 = vrot.lane.b32.xlu0 %v468, 2
      %v471 = vpop.permute.xlu0 %470
      %vm473 = vcmask 589368
      %474 = vst.msk [vmem:[#allocation2] sm:$0xff] %vm473, %v471
      %v475 = vld [vmem:[#allocation2] sm:$0xff]
      %477 = vrot.lane.b32.xlu0 %v475, 126
      %v478 = vpop.permute.xlu0 %477
      %vm480 = vcmask 597568
      %481 = vst.msk [vmem:[#allocation2] sm:$0xff] %vm480, %v478
      %v482 = vld [vmem:[#allocation2] sm:$0xff]
      %484 = vrot.lane.b32.xlu0 %v482, 2
      %v485 = vpop.permute.xlu0 %484
      %vm487 = vcmask 736968
      %488 = vst.msk [vmem:[#allocation2] sm:$0xff] %vm487, %v485
      %v489 = vld [vmem:[#allocation2] sm:$0xff]
      %491 = vrot.lane.b32.xlu0 %v489, 126
      %v492 = vpop.permute.xlu0 %491
      %vm494 = vcmask 745168
      %495 = vst.msk [vmem:[#allocation2] sm:$0xff] %vm494, %v492
      %v496 = vld [vmem:[#allocation2] sm:$0xff]
      %498 = vrot.lane.b32.xlu0 %v496, 2
      %v499 = vpop.permute.xlu0 %498
      %vm501 = vcmask 884568
      %502 = vst.msk [vmem:[#allocation2] sm:$0xff] %vm501, %v499
      %v503 = vld [vmem:[#allocation2] sm:$0xff]
      %505 = vrot.lane.b32.xlu0 %v503, 126
      %v506 = vpop.permute.xlu0 %505
      %vm508 = vcmask 892768
      %509 = vst.msk [vmem:[#allocation2] sm:$0xff] %vm508, %v506
      %v510 = vld [vmem:[#allocation2] sm:$0xff]
      %512 = vrot.lane.b32.xlu0 %v510, 2
      %v513 = vpop.permute.xlu0 %512
      %vm515 = vcmask 1032168
      %516 = vst.msk [vmem:[#allocation2] sm:$0xff] %vm515, %v513
      %v517 = vld [vmem:[#allocation2 + $0x8] sm:$0xff]
      %519 = vrot.lane.b32.xlu0 %v517, 126
      %v520 = vpop.permute.xlu0 %519
      %vm522 = vcmask 1040368
      %523 = vst.msk [vmem:[#allocation2] sm:$0xff] %vm522, %v520
      %v524 = vld [vmem:[#allocation2 + $0x8] sm:$0xff]
      %526 = vrot.lane.b32.xlu0 %v524, 2
      %v527 = vpop.permute.xlu0 %526
      %vm529 = vcmask 130168
      %530 = vst.msk [vmem:[#allocation2 + $0x8] sm:$0xff] %vm529, %v527
      %v531 = vld [vmem:[#allocation2 + $0x8] sm:$0xff]
      %533 = vrot.lane.b32.xlu0 %v531, 126
      %v534 = vpop.permute.xlu0 %533
      %vm536 = vcmask 138368
      %537 = vst.msk [vmem:[#allocation2 + $0x8] sm:$0xff] %vm536, %v534
      %v538 = vld [vmem:[#allocation2 + $0x8] sm:$0xff]
      %540 = vrot.lane.b32.xlu0 %v538, 2
      %v541 = vpop.permute.xlu0 %540
      %vm543 = vcmask 277768
      %544 = vst.msk [vmem:[#allocation2 + $0x8] sm:$0xff] %vm543, %v541
      %v545 = vld [vmem:[#allocation2 + $0x8] sm:$0xff]
      %547 = vrot.lane.b32.xlu0 %v545, 126
      %v548 = vpop.permute.xlu0 %547
      %vm550 = vcmask 285968
      %551 = vst.msk [vmem:[#allocation2 + $0x8] sm:$0xff] %vm550, %v548
      %v552 = vld [vmem:[#allocation2 + $0x8] sm:$0xff]
      %554 = vrot.lane.b32.xlu0 %v552, 2
      %v555 = vpop.permute.xlu0 %554
      %vm557 = vcmask 425368
      %558 = vst.msk [vmem:[#allocation2 + $0x8] sm:$0xff] %vm557, %v555
      %v559 = vld [vmem:[#allocation2 + $0x8] sm:$0xff]
      %561 = vrot.lane.b32.xlu0 %v559, 126
      %v562 = vpop.permute.xlu0 %561
      %vm564 = vcmask 433568
      %565 = vst.msk [vmem:[#allocation2 + $0x8] sm:$0xff] %vm564, %v562
      %v566 = vld [vmem:[#allocation2 + $0x8] sm:$0xff]
      %568 = vrot.lane.b32.xlu0 %v566, 2
      %v569 = vpop.permute.xlu0 %568
      %vm571 = vcmask 572968
      %572 = vst.msk [vmem:[#allocation2 + $0x8] sm:$0xff] %vm571, %v569
      %v573 = vld [vmem:[#allocation2 + $0x8] sm:$0xff]
      %575 = vrot.lane.b32.xlu0 %v573, 126
      %v576 = vpop.permute.xlu0 %575
      %vm578 = vcmask 581168
      %579 = vst.msk [vmem:[#allocation2 + $0x8] sm:$0xff] %vm578, %v576
      %v580 = vld [vmem:[#allocation2 + $0x8] sm:$0xff]
      %582 = vrot.lane.b32.xlu0 %v580, 2
      %v583 = vpop.permute.xlu0 %582
      %vm585 = vcmask 720568
      %586 = vst.msk [vmem:[#allocation2 + $0x8] sm:$0xff] %vm585, %v583
      %v587 = vld [vmem:[#allocation2 + $0x8] sm:$0xff]
      %589 = vrot.lane.b32.xlu0 %v587, 126
      %v590 = vpop.permute.xlu0 %589
      %vm592 = vcmask 728768
      %593 = vst.msk [vmem:[#allocation2 + $0x8] sm:$0xff] %vm592, %v590
      %v594 = vld [vmem:[#allocation2 + $0x8] sm:$0xff]
      %596 = vrot.lane.b32.xlu0 %v594, 2
      %v597 = vpop.permute.xlu0 %596
      %vm599 = vcmask 868168
      %600 = vst.msk [vmem:[#allocation2 + $0x8] sm:$0xff] %vm599, %v597
      %v601 = vld [vmem:[#allocation2 + $0x8] sm:$0xff]
      %603 = vrot.lane.b32.xlu0 %v601, 126
      %v604 = vpop.permute.xlu0 %603
      %vm606 = vcmask 876368
      %607 = vst.msk [vmem:[#allocation2 + $0x8] sm:$0xff] %vm606, %v604
      %v608 = vld [vmem:[#allocation2 + $0x8] sm:$0xff]
      %610 = vrot.lane.b32.xlu0 %v608, 2
      %v611 = vpop.permute.xlu0 %610
      %vm613 = vcmask 1015768
      %614 = vst.msk [vmem:[#allocation2 + $0x8] sm:$0xff] %vm613, %v611
      %v615 = vld [vmem:[#allocation2 + $0x8] sm:$0xff]
      %617 = vrot.lane.b32.xlu0 %v615, 126
      %v618 = vpop.permute.xlu0 %617
      %vm620 = vcmask 1023968
      %621 = vst.msk [vmem:[#allocation2 + $0x8] sm:$0xff] %vm620, %v618
      %v622 = vld [vmem:[#allocation2 + $0x10] sm:$0xff]
      %624 = vrot.lane.b32.xlu0 %v622, 2
      %v625 = vpop.permute.xlu0 %624
      %vm627 = vcmask 113768
      %628 = vst.msk [vmem:[#allocation2 + $0x10] sm:$0xff] %vm627, %v625
      %v629 = vld [vmem:[#allocation2 + $0x10] sm:$0xff]
      %631 = vrot.lane.b32.xlu0 %v629, 126
      %v632 = vpop.permute.xlu0 %631
      %vm634 = vcmask 121968
      %635 = vst.msk [vmem:[#allocation2 + $0x10] sm:$0xff] %vm634, %v632
      %v636 = vld [vmem:[#allocation2 + $0x10] sm:$0xff]
      %638 = vrot.lane.b32.xlu0 %v636, 2
      %v639 = vpop.permute.xlu0 %638
      %vm641 = vcmask 261368
      %642 = vst.msk [vmem:[#allocation2 + $0x10] sm:$0xff] %vm641, %v639
      %v643 = vld [vmem:[#allocation2 + $0x10] sm:$0xff]
      %645 = vrot.lane.b32.xlu0 %v643, 126
      %v646 = vpop.permute.xlu0 %645
      %vm648 = vcmask 269568
      %649 = vst.msk [vmem:[#allocation2 + $0x10] sm:$0xff] %vm648, %v646
      %v650 = vld [vmem:[#allocation2 + $0x10] sm:$0xff]
      %652 = vrot.lane.b32.xlu0 %v650, 2
      %v653 = vpop.permute.xlu0 %652
      %vm655 = vcmask 408968
      %656 = vst.msk [vmem:[#allocation2 + $0x10] sm:$0xff] %vm655, %v653
      %v657 = vld [vmem:[#allocation2] sm:$0xff]
      %659 = vrot.lane.b32.xlu0 %v657, 92
      %v660 = vpop.permute.xlu0 %659
      %vm662 = vcmask 146432
      %663 = vst.msk [vmem:[#allocation2] sm:$0xff] %vm662, %v660
      %v664 = vld [vmem:[#allocation2 + $0x10] sm:$0xff]
      %666 = vrot.lane.b32.xlu0 %v664, 36
      %v667 = vpop.permute.xlu0 %666
      %vm669 = vcmask 556432
      %670 = vst.msk [vmem:[#allocation2 + $0x10] sm:$0xff] %vm669, %v667
      %vm671 = vcmask 704032
      %672 = vst.msk [vmem:[#allocation2 + $0x10] sm:$0xff] %vm671, 0.0
      %v673 = vld [vmem:[#allocation2] sm:$0xff]
      %v674 = vld [vmem:[#allocation2 + $0x8] sm:$0xff]
      %v675 = vld [vmem:[#allocation2 + $0x10] sm:$0xff]
      %679 = vrot.lane.b32.xlu0 %v673, 127
      %v680 = vpop.permute.xlu0 %679
      %681 = vrot.lane.b32.xlu0 %v674, 127
      %v682 = vpop.permute.xlu0 %681
      %683 = vrot.lane.b32.xlu0 %v675, 127
      %v684 = vpop.permute.xlu0 %683
      %v685 = vsel %vm212, %v680, %v682
      %v686 = vsel %vm212, %v682, %v684
      %690 = vrot.lane.b32.xlu0 %v673, 126
      %v691 = vpop.permute.xlu0 %690
      %692 = vrot.lane.b32.xlu0 %v674, 126
      %v693 = vpop.permute.xlu0 %692
      %694 = vrot.lane.b32.xlu0 %v675, 126
      %v695 = vpop.permute.xlu0 %694
      %v696 = vsel %vm221, %v691, %v693
      %v697 = vsel %vm221, %v693, %v695
      %701 = vrot.lane.b32.xlu0 %v673, 110
      %v702 = vpop.permute.xlu0 %701
      %703 = vrot.lane.b32.xlu0 %v674, 110
      %v704 = vpop.permute.xlu0 %703
      %705 = vrot.lane.b32.xlu0 %v675, 110
      %v706 = vpop.permute.xlu0 %705
      %v707 = vsel %vm230, %v702, %v704
      %v708 = vsel %vm230, %v704, %v706
      %712 = vrot.lane.b32.xlu0 %v673, 109
      %v713 = vpop.permute.xlu0 %712
      %714 = vrot.lane.b32.xlu0 %v674, 109
      %v715 = vpop.permute.xlu0 %714
      %716 = vrot.lane.b32.xlu0 %v675, 109
      %v717 = vpop.permute.xlu0 %716
      %v718 = vsel %vm239, %v713, %v715
      %v719 = vsel %vm239, %v715, %v717
      %723 = vrot.lane.b32.xlu0 %v673, 108
      %v724 = vpop.permute.xlu0 %723
      %725 = vrot.lane.b32.xlu0 %v674, 108
      %v726 = vpop.permute.xlu0 %725
      %727 = vrot.lane.b32.xlu0 %v675, 108
      %v728 = vpop.permute.xlu0 %727
      %v729 = vsel %vm248, %v724, %v726
      %v730 = vsel %vm248, %v726, %v728
      %734 = vrot.lane.b32.xlu0 %v673, 92
      %v735 = vpop.permute.xlu0 %734
      %736 = vrot.lane.b32.xlu0 %v674, 92
      %v737 = vpop.permute.xlu0 %736
      %738 = vrot.lane.b32.xlu0 %v675, 92
      %v739 = vpop.permute.xlu0 %738
      %v740 = vsel %vm257, %v735, %v737
      %v741 = vsel %vm257, %v737, %v739
      %745 = vrot.lane.b32.xlu0 %v673, 91
      %v746 = vpop.permute.xlu0 %745
      %747 = vrot.lane.b32.xlu0 %v674, 91
      %v748 = vpop.permute.xlu0 %747
      %749 = vrot.lane.b32.xlu0 %v675, 91
      %v750 = vpop.permute.xlu0 %749
      %v751 = vsel %vm266, %v746, %v748
      %v752 = vsel %vm266, %v748, %v750
      %756 = vrot.lane.b32.xlu0 %v673, 90
      %v757 = vpop.permute.xlu0 %756
      %758 = vrot.lane.b32.xlu0 %v674, 90
      %v759 = vpop.permute.xlu0 %758
      %760 = vrot.lane.b32.xlu0 %v675, 90
      %v761 = vpop.permute.xlu0 %760
      %v762 = vsel %vm275, %v757, %v759
      %v763 = vsel %vm275, %v759, %v761
      %v767 = vpack.c.bf16 %v685, %v673
      %v768 = vpack.c.bf16 %v686, %v674
      %v769 = vpack.c.bf16 %v684, %v675
      %v770 = vpack.c.bf16 %v707, %v696
      %v771 = vpack.c.bf16 %v708, %v697
      %v772 = vpack.c.bf16 %v706, %v695
      %v773 = vpack.c.bf16 %v729, %v718
      %v774 = vpack.c.bf16 %v730, %v719
      %v775 = vpack.c.bf16 %v728, %v717
      %v776 = vpack.c.bf16 %v751, %v740
      %v777 = vpack.c.bf16 %v752, %v741
      %v778 = vpack.c.bf16 %v750, %v739
      %v779 = vpack.c.bf16 %v762, %v762
      %v780 = vpack.c.bf16 %v763, %v763
      %v781 = vpack.c.bf16 %v761, %v761
      %v782 = vld [vmem:[%s2] sm:$0xf]
      %v783 = vld [vmem:[%s3] sm:$0xf]
      %v784 = vcombine.high %v200, %v200
      %v786 = vpack.c.bf16 %v200, %v200
      %v787 = vpack.c.bf16 %v784, %v784
      %v788 = vpack.c.bf16 %v201, %v201
      %792 = vrot.lane.b32.xlu0 %v786, 109
      %v793 = vpop.permute.xlu0 %792
      %794 = vrot.lane.b32.xlu0 %v787, 109
      %v795 = vpop.permute.xlu0 %794
      %796 = vrot.lane.b32.xlu0 %v788, 109
      %v797 = vpop.permute.xlu0 %796
      %vm798 = vcmask 891904
      %v799 = vsel %vm798, %v793, %v795
      %v800 = vsel %vm798, %v795, %v797
      %vm801 = vcmask 31744
      %v803 = vsel %vm801, %v783, 0
      %v806 = vsel %vm319, %v799, 0
      %v809 = vsel %vm319, %v800, 0
      %v812 = vsel %vm319, %v797, 0
      %814 = vmatprep.subr.bf16.mxu0 %v809
      %815 = vmatpush1.bf16.msra.mxu0 %v806
      %816 = vmatprep.subr.bf16.mxu0 0
      %817 = vmatpush1.bf16.msra.mxu0 0
      %818 = vmatprep.subr.bf16.mxu0 0
      %819 = vmatpush1.bf16.msra.mxu0 0
      %820 = vmatprep.subr.bf16.mxu0 0
      %821 = vmatpush1.bf16.msra.mxu0 0
      %822 = vmatprep.subr.bf16.mxu0 0
      %823 = vmatpush1.bf16.msra.mxu0 0
      %824 = vmatprep.subr.bf16.mxu0 0
      %825 = vmatpush1.bf16.msra.mxu0 0
      %826 = vmatprep.subr.bf16.mxu0 0
      %827 = vmatpush1.bf16.msra.mxu0 0
      %828 = vmatprep.subr.bf16.mxu0 0
      %829 = vmatpush1.bf16.msra.mxu0 0
      %830 = vmatprep.subr.bf16.mxu0 0
      %831 = vmatpush1.bf16.msra.mxu0 0
      %832 = vmatprep.subr.bf16.mxu0 0
      %833 = vmatpush1.bf16.msra.mxu0 0
      %834 = vmatprep.subr.bf16.mxu0 0
      %835 = vmatpush1.bf16.msra.mxu0 0
      %836 = vmatprep.subr.bf16.mxu0 0
      %837 = vmatpush1.bf16.msra.mxu0 0
      %838 = vmatprep.subr.bf16.mxu0 0
      %839 = vmatpush1.bf16.msra.mxu0 0
      %840 = vmatprep.subr.bf16.mxu0 0
      %841 = vmatpush1.bf16.msra.mxu0 0
      %842 = vmatprep.subr.bf16.mxu0 0
      %843 = vmatpush1.bf16.msra.mxu0 0
      %844 = vmatprep.subr.bf16.mxu0 0
      %845 = vmatpush1.bf16.msra.mxu0 0
      %846 = vmatprep.mubr.bf16.mxu0 0
      %847 = vmatmul.mubr.bf16.gmra.mrb[0].mxu0 %v803
      %v848 = vpop.f32.mrb[0].mxu0
      %v849 = vadd.f32 0.0, %v848
      %v850 = vpop.f32.mrb[0].mxu0
      %v851 = vadd.f32 0.0, %v850
      %v852 = vpop.f32.mrb[0].mxu0
      %v853 = vpop.f32.mrb[0].mxu0
      %854 = vdwg.mxu0
      %855 = vmatprep.subr.bf16.mxu0 0
      %856 = vmatpush1.bf16.msra.mxu0 %v812
      %857 = vmatprep.subr.bf16.mxu0 0
      %858 = vmatpush1.bf16.msra.mxu0 0
      %859 = vmatprep.subr.bf16.mxu0 0
      %860 = vmatpush1.bf16.msra.mxu0 0
      %861 = vmatprep.subr.bf16.mxu0 0
      %862 = vmatpush1.bf16.msra.mxu0 0
      %863 = vmatprep.subr.bf16.mxu0 0
      %864 = vmatpush1.bf16.msra.mxu0 0
      %865 = vmatprep.subr.bf16.mxu0 0
      %866 = vmatpush1.bf16.msra.mxu0 0
      %867 = vmatprep.subr.bf16.mxu0 0
      %868 = vmatpush1.bf16.msra.mxu0 0
      %869 = vmatprep.subr.bf16.mxu0 0
      %870 = vmatpush1.bf16.msra.mxu0 0
      %871 = vmatprep.subr.bf16.mxu0 0
      %872 = vmatpush1.bf16.msra.mxu0 0
      %873 = vmatprep.subr.bf16.mxu0 0
      %874 = vmatpush1.bf16.msra.mxu0 0
      %875 = vmatprep.subr.bf16.mxu0 0
      %876 = vmatpush1.bf16.msra.mxu0 0
      %877 = vmatprep.subr.bf16.mxu0 0
      %878 = vmatpush1.bf16.msra.mxu0 0
      %879 = vmatprep.subr.bf16.mxu0 0
      %880 = vmatpush1.bf16.msra.mxu0 0
      %881 = vmatprep.subr.bf16.mxu0 0
      %882 = vmatpush1.bf16.msra.mxu0 0
      %883 = vmatprep.subr.bf16.mxu0 0
      %884 = vmatpush1.bf16.msra.mxu0 0
      %885 = vmatprep.subr.bf16.mxu0 0
      %886 = vmatpush1.bf16.msra.mxu0 0
      %887 = vmatprep.mubr.bf16.mxu0 0
      %888 = vmatmul.mubr.bf16.gmra.mrb[0].mxu0 %v803
      %v889 = vpop.f32.mrb[0].mxu0
      %v890 = vadd.f32 0.0, %v889
      %v891 = vpop.f32.mrb[0].mxu0
      %v892 = vpop.f32.mrb[0].mxu0
      %v893 = vpop.f32.mrb[0].mxu0
      %894 = vdwg.mxu0
      %vm895 = vcmask 588800
      %v897 = vsel %vm895, %v782, 0
      %v900 = vsel %vm210, %v779, 0
      %v903 = vsel %vm210, %v780, 0
      %v906 = vsel %vm210, %v781, 0
      %908 = vmatprep.subr.bf16.mxu0 %v768
      %909 = vmatpush1.bf16.msra.mxu0 %v767
      %910 = vmatprep.subr.bf16.mxu0 %v771
      %911 = vmatpush1.bf16.msra.mxu0 %v770
      %912 = vmatprep.subr.bf16.mxu0 %v774
      %913 = vmatpush1.bf16.msra.mxu0 %v773
      %914 = vmatprep.subr.bf16.mxu0 %v777
      %915 = vmatpush1.bf16.msra.mxu0 %v776
      %916 = vmatprep.subr.bf16.mxu0 %v903
      %917 = vmatpush1.bf16.msra.mxu0 %v900
      %918 = vmatprep.subr.bf16.mxu0 0
      %919 = vmatpush1.bf16.msra.mxu0 0
      %920 = vmatprep.subr.bf16.mxu0 0
      %921 = vmatpush1.bf16.msra.mxu0 0
      %922 = vmatprep.subr.bf16.mxu0 0
      %923 = vmatpush1.bf16.msra.mxu0 0
      %924 = vmatprep.subr.bf16.mxu0 0
      %925 = vmatpush1.bf16.msra.mxu0 0
      %926 = vmatprep.subr.bf16.mxu0 0
      %927 = vmatpush1.bf16.msra.mxu0 0
      %928 = vmatprep.subr.bf16.mxu0 0
      %929 = vmatpush1.bf16.msra.mxu0 0
      %930 = vmatprep.subr.bf16.mxu0 0
      %931 = vmatpush1.bf16.msra.mxu0 0
      %932 = vmatprep.subr.bf16.mxu0 0
      %933 = vmatpush1.bf16.msra.mxu0 0
      %934 = vmatprep.subr.bf16.mxu0 0
      %935 = vmatpush1.bf16.msra.mxu0 0
      %936 = vmatprep.subr.bf16.mxu0 0
      %937 = vmatpush1.bf16.msra.mxu0 0
      %938 = vmatprep.subr.bf16.mxu0 0
      %939 = vmatpush1.bf16.msra.mxu0 0
      %940 = vmatprep.mubr.bf16.mxu0 0
      %941 = vmatmul.mubr.bf16.gmra.mrb[0].mxu0 %v897
      %v942 = vpop.f32.mrb[0].mxu0
      %v943 = vadd.f32 %v849, %v942
      %v944 = vpop.f32.mrb[0].mxu0
      %v945 = vadd.f32 %v851, %v944
      %v946 = vpop.f32.mrb[0].mxu0
      %v947 = vpop.f32.mrb[0].mxu0
      %948 = vdwg.mxu0
      %949 = vmatprep.subr.bf16.mxu0 0
      %950 = vmatpush1.bf16.msra.mxu0 %v769
      %951 = vmatprep.subr.bf16.mxu0 0
      %952 = vmatpush1.bf16.msra.mxu0 %v772
      %953 = vmatprep.subr.bf16.mxu0 0
      %954 = vmatpush1.bf16.msra.mxu0 %v775
      %955 = vmatprep.subr.bf16.mxu0 0
      %956 = vmatpush1.bf16.msra.mxu0 %v778
      %957 = vmatprep.subr.bf16.mxu0 0
      %958 = vmatpush1.bf16.msra.mxu0 %v906
      %959 = vmatprep.subr.bf16.mxu0 0
      %960 = vmatpush1.bf16.msra.mxu0 0
      %961 = vmatprep.subr.bf16.mxu0 0
      %962 = vmatpush1.bf16.msra.mxu0 0
      %963 = vmatprep.subr.bf16.mxu0 0
      %964 = vmatpush1.bf16.msra.mxu0 0
      %965 = vmatprep.subr.bf16.mxu0 0
      %966 = vmatpush1.bf16.msra.mxu0 0
      %967 = vmatprep.subr.bf16.mxu0 0
      %968 = vmatpush1.bf16.msra.mxu0 0
      %969 = vmatprep.subr.bf16.mxu0 0
      %970 = vmatpush1.bf16.msra.mxu0 0
      %971 = vmatprep.subr.bf16.mxu0 0
      %972 = vmatpush1.bf16.msra.mxu0 0
      %973 = vmatprep.subr.bf16.mxu0 0
      %974 = vmatpush1.bf16.msra.mxu0 0
      %975 = vmatprep.subr.bf16.mxu0 0
      %976 = vmatpush1.bf16.msra.mxu0 0
      %977 = vmatprep.subr.bf16.mxu0 0
      %978 = vmatpush1.bf16.msra.mxu0 0
      %979 = vmatprep.subr.bf16.mxu0 0
      %980 = vmatpush1.bf16.msra.mxu0 0
      %981 = vmatprep.mubr.bf16.mxu0 0
      %982 = vmatmul.mubr.bf16.gmra.mrb[0].mxu0 %v897
      %v983 = vpop.f32.mrb[0].mxu0
      %v984 = vadd.f32 %v890, %v983
      %v985 = vpop.f32.mrb[0].mxu0
      %v986 = vpop.f32.mrb[0].mxu0
      %v987 = vpop.f32.mrb[0].mxu0
      %988 = vdwg.mxu0
      %v989 = vmax.f32 %v943, 0.0
      %v990 = vmax.f32 %v945, 0.0
      %v991 = vmax.f32 %v984, 0.0
      %992 = vst [vmem:[%s197] sm:$0xff] %v989
      %993 = vst [vmem:[%s197 + $0x8] sm:$0xff] %v990
      %vm994 = vcmask 261120
      %995 = vst.msk [vmem:[%s197 + $0x10] sm:$0xff] %vm994, %v991
      %p996 = scmp.lt.s32.totalorder %s15, 1
      %s997 = scalar_select %p996, %s15, 1
      %s998 = smul.addr %s997, 3
      %s999 = smul.addr %s998, 8
      %s1000 = scalar_lea.vmem %s4, %s999
      // Predicated region
      $region37: #{res_layer_forward.1} parent=35 // pred_check
        %p1001 = pneg %p122
      $region38: #{res_layer_forward.1} parent=35 // pred_check_branch
        %1003 = sbr.rel (%p1001) target = $region40
      $region39: #{res_layer_forward.1} parent=35 // pred_region
        _
      $region40: #{res_layer_forward.1} parent=35 // pred_fallthru
        _
    $region36: #{res_layer_forward.1} parent=5 // pred_fallthru
      _
    %p1004 = scmp.le.s32.totalorder 2, %s10
    // Predicated region
    $region41: #{res_layer_forward.1} parent=5 // pred_check
      %p1005 = pneg %p1004
    $region42: #{res_layer_forward.1} parent=5 // pred_check_branch
      %1007 = sbr.rel (%p1005) target = $region44
    $region43: #{res_layer_forward.1} parent=5 // pred_region
      %s1008 = ssub.s32 %s10, 2
      // Predicated region
      $region45: #{res_layer_forward.1} parent=43 // pred_check
        %p1009 = pneg %p128
      $region46: #{res_layer_forward.1} parent=43 // pred_check_branch
        %1011 = sbr.rel (%p1009) target = $region48
      $region47: #{res_layer_forward.1} parent=43 // pred_region
        %p1012 = scmp.lt.s32.totalorder %s16, 1
        %s1013 = scalar_select %p1012, %s16, 1
        %s1014 = smul.addr %s1013, 3
        %s1015 = smul.addr %s1014, 8
        %s1016 = scalar_lea.vmem %s4, %s1015
      $region48: #{res_layer_forward.1} parent=43 // pred_fallthru
        _
    $region44: #{res_layer_forward.1} parent=5 // pred_fallthru
      _
  $region6: #{res_layer_forward.1} parent=0 // loop_footer
    %s14 = sadd.s32 1, %s10
  $region7: #{res_layer_forward.1} parent=0 // loop_footer_branch
    %9 = sbr.rel target = $region3
  $region8: #{res_layer_forward.1} parent=0 // loop_exit
    _

</llo_original>
